<compile_context>
chip_gen: v5e
topology: v5e:2x2
jax: 0.10.0
libtpu: 0.0.40
codegen_flags: <defaults>
</compile_context>

<pallas_src>
import functools

import jax
import jax.numpy as jnp
from jax import lax
from jax.experimental import pallas as pl
from jax.experimental.pallas import tpu as pltpu

NCLASSES = 250
EPS = 1e-5


def _round_up(x, m):
    return (x + m - 1) // m * m


# ------------------------ generation-aware tiling ---------------------------

def _select_tiles():
    """(TM, TN, TK, vmem_limit_bytes) chosen per TPU generation."""
    try:
        kind = jax.devices()[0].device_kind.lower()
    except Exception:  # pragma: no cover
        kind = ""
    if ("v5 lite" in kind) or ("v5e" in kind):
        # v5e: 4x128^2 MXU, 1 vst slot -> keep M/N tiles at 128, long K.
        return 128, 128, 512, 32 << 20
    if ("v6" in kind) or ("trillium" in kind):
        # v6e: 2x256^2 MXU, 128 MiB VMEM -> bigger tiles.
        return 512, 256, 512, 64 << 20
    if ("v7" in kind) or ("7x" in kind):
        # v7x: 64 MiB VMEM (32 MiB scoped) -> same tiles, explicit budget.
        return 512, 256, 256, 32 << 20
    # Unknown / older chips: conservative.
    return 128, 128, 256, None


TM, TN, TK, VMEM_LIMIT = _select_tiles()


def _pick_block(n, t):
    """Lane-dim (or K-dim) block: multiple of 128, capped at t."""
    return t if n >= t else _round_up(n, 128)


def _pick_m(m):
    """Row-dim block + padded extent (bf16-friendly sublane multiple)."""
    bm = TM if m >= TM else _round_up(m, 16)
    return bm, _round_up(m, bm)


# ------------------------------ GEMM kernel ----------------------------------
# Tiled GEMM, bf16 operands, f32 accumulation, fused bias (BN scale is folded
# into the weights at init) + optional residual-add + optional ReLU epilogue.

def _gemm_kernel(*refs, relu, fuse_add):
    if fuse_add:
        a_ref, b_ref, bias_ref, id_ref, o_ref, acc_ref = refs
    else:
        a_ref, b_ref, bias_ref, o_ref, acc_ref = refs
        id_ref = None
    k = pl.program_id(2)

    @pl.when(k == 0)
    def _init():
        acc_ref[...] = jnp.zeros_like(acc_ref)

    acc_ref[...] += jnp.dot(a_ref[...], b_ref[...],
                            preferred_element_type=jnp.float32)

    @pl.when(k == pl.num_programs(2) - 1)
    def _finalize():
        y = acc_ref[...] + bias_ref[...]
        if fuse_add:
            y = y + id_ref[...].astype(jnp.float32)
        if relu:
            y = jnp.maximum(y, 0.0)
        o_ref[...] = y.astype(o_ref.dtype)


@functools.lru_cache(maxsize=None)
def _get_gemm_call(Mp, Kp, Np, bm, bk, bn, relu, fuse_add, out_dtype):
    in_specs = [
        pl.BlockSpec((bm, bk), lambda i, j, k: (i, k)),   # A (bf16)
        pl.BlockSpec((bk, bn), lambda i, j, k: (k, j)),   # B (bf16, scale folded)
        pl.BlockSpec((1, bn), lambda i, j, k: (0, j)),    # bias (f32, k-invariant)
    ]
    if fuse_add:
        in_specs.append(pl.BlockSpec((bm, bn), lambda i, j, k: (i, j)))  # identity
    out_bytes = jnp.dtype(out_dtype).itemsize
    flops = 2 * Mp * Np * Kp
    bytes_accessed = (2 * (Mp * Kp + Kp * Np) + Mp * Np * out_bytes + 4 * Np
                      + (2 * Mp * Np if fuse_add else 0))
    f = pl.pallas_call(
        functools.partial(_gemm_kernel, relu=relu, fuse_add=fuse_add),
        out_shape=jax.ShapeDtypeStruct((Mp, Np), out_dtype),
        grid_spec=pltpu.PrefetchScalarGridSpec(
            num_scalar_prefetch=0,
            grid=(Mp // bm, Np // bn, Kp // bk),
            in_specs=in_specs,
            out_specs=pl.BlockSpec((bm, bn), lambda i, j, k: (i, j)),
            scratch_shapes=[pltpu.VMEM((bm, bn), jnp.float32)],
        ),
        compiler_params=pltpu.CompilerParams(
            dimension_semantics=("parallel", "parallel", "arbitrary"),
            vmem_limit_bytes=VMEM_LIMIT),
        cost_estimate=pl.CostEstimate(flops=flops, transcendentals=0,
                                      bytes_accessed=bytes_accessed),
    )
    return jax.jit(f)


def gemm_bias_act(a, w_pad, bias_pad, *, relu, n_valid, identity=None,
                  out_dtype=jnp.bfloat16):
    """out[:M,:n_valid] = act(a @ w_pad + bias (+ identity)).

    `w_pad` / `bias_pad` are already padded + bf16/f32 (cached at init).
    A / identity are padded only when misaligned.
    """
    M, K = a.shape
    Kp, Np = w_pad.shape
    bm, Mp = _pick_m(M)
    bk = _pick_block(K, TK)
    bn = _pick_block(n_valid, TN)
    assert Kp == _round_up(K, bk) and Np == _round_up(n_valid, bn)

    a = a.astype(jnp.bfloat16)
    if (Mp, Kp) != (M, K):
        a = jnp.pad(a, ((0, Mp - M), (0, Kp - K)))
    if identity is not None:
        identity = identity.astype(jnp.bfloat16)
        if identity.shape != (Mp, Np):
            identity = jnp.pad(
                identity, ((0, Mp - M), (0, Np - identity.shape[1])))
    args = (a, w_pad, bias_pad) + ((identity,) if identity is not None else ())
    out = _get_gemm_call(Mp, Kp, Np, bm, bk, bn, bool(relu),
                         identity is not None, out_dtype)(*args)
    if (Mp, Np) != (M, n_valid):
        out = out[:M, :n_valid]
    return out


# ----------------------- direct 3x3 stride-1 conv kernel ---------------------
# No im2col: the padded image is flattened to rows [(H+3)*(W+2), Cin]; each of
# the 9 taps is a shifted contiguous row-window of the SAME VMEM block.  The
# "wide" output (H*(W+2) rows) is computed and the invalid columns are sliced
# off outside.  Bias + ReLU fused in the epilogue.

def _conv3x3_kernel(x_ref, w_ref, b_ref, o_ref, acc_ref, *, wp, m_wide, cin):
    acc_ref[...] = jnp.zeros_like(acc_ref)
    for t in range(9):
        di, dj = t // 3, t % 3
        off = di * wp + dj                       # static element offset
        a_t = x_ref[0, off:off + m_wide, :]      # (m_wide, Cin) bf16
        w_t = w_ref[t * cin:(t + 1) * cin, :]    # (Cin, Cout) bf16
        acc_ref[...] += jnp.dot(a_t, w_t, preferred_element_type=jnp.float32)
    y = acc_ref[...] + b_ref[...]
    o_ref[0] = jnp.maximum(y, 0.0).astype(o_ref.dtype)


@functools.lru_cache(maxsize=None)
def _get_conv3x3_call(N, R, cin, cout, wp, m_wide):
    flops = 2 * N * m_wide * 9 * cin * cout
    bytes_accessed = N * (R * cin * 2 + m_wide * cout * 2) + 9 * cin * cout * 2 + 4 * cout
    f = pl.pallas_call(
        functools.partial(_conv3x3_kernel, wp=wp, m_wide=m_wide, cin=cin),
        out_shape=jax.ShapeDtypeStruct((N, m_wide, cout), jnp.bfloat16),
        grid_spec=pltpu.PrefetchScalarGridSpec(
            num_scalar_prefetch=0,
            grid=(N,),
            in_specs=[
                pl.BlockSpec((1, R, cin), lambda n: (n, 0, 0)),      # padded image
                pl.BlockSpec((9 * cin, cout), lambda n: (0, 0)),     # weights
                pl.BlockSpec((1, cout), lambda n: (0, 0)),           # bias
            ],
            out_specs=pl.BlockSpec((1, m_wide, cout), lambda n: (n, 0, 0)),
            scratch_shapes=[pltpu.VMEM((m_wide, cout), jnp.float32)],
        ),
        compiler_params=pltpu.CompilerParams(
            dimension_semantics=("parallel",),   # batch axis shards across TCs (v7x)
            vmem_limit_bytes=VMEM_LIMIT),
        cost_estimate=pl.CostEstimate(flops=flops, transcendentals=0,
                                      bytes_accessed=bytes_accessed),
    )
    return jax.jit(f)


def conv3x3_direct(x, w, bias):
    """3x3, stride 1, pad 1 conv + folded BN + ReLU (bf16 in / bf16 out)."""
    N, H, W, Cin = x.shape
    Cout = w.shape[1]
    wp = W + 2
    xp = jnp.pad(x.astype(jnp.bfloat16), ((0, 0), (1, 2), (1, 1), (0, 0)))
    R = (H + 3) * wp
    xf = xp.reshape(N, R, Cin)                  # free reshape (contiguous)
    m_wide = H * wp
    ow = _get_conv3x3_call(N, R, Cin, Cout, wp, m_wide)(xf, w, bias)
    return ow.reshape(N, H, wp, Cout)[:, :, :W, :]


# ------------------------------ JAX glue ops ---------------------------------

def _im2col(x, kh, kw, stride, pad):
    """x: NHWC (bf16) -> (N*Ho*Wo, kh*kw*C) patches, (kh, kw, C) flat order."""
    N, H, W, C = x.shape
    Ho = (H + 2 * pad - kh) // stride + 1
    Wo = (W + 2 * pad - kw) // stride + 1
    xp = jnp.pad(x, ((0, 0), (pad, pad), (pad, pad), (0, 0)))
    cols = []
    for i in range(kh):
        for j in range(kw):
            cols.append(xp[:, i:i + (Ho - 1) * stride + 1:stride,
                           j:j + (Wo - 1) * stride + 1:stride, :])
    patches = jnp.concatenate(cols, axis=-1)
    return patches.reshape(N * Ho * Wo, kh * kw * C), (N, Ho, Wo)


def maxpool(x, k=3, stride=2, pad=1):
    neg_inf = jnp.array(-jnp.inf, dtype=x.dtype)
    return lax.reduce_window(
        x, neg_inf, lax.max,
        window_dimensions=(1, k, k, 1),
        window_strides=(1, stride, stride, 1),
        padding=((0, 0), (pad, pad), (pad, pad), (0, 0)))


def conv_bn(x, cp, identity=None, relu=True):
    """Conv2d (no bias) + folded BN + optional fused residual + optional ReLU."""
    if cp["kind"] == "direct":                  # 3x3 stride-1: direct kernel
        return conv3x3_direct(x, cp["w"], cp["b"])
    kh, kw, stride, pad = cp["kh"], cp["kw"], cp["stride"], cp["pad"]
    if kh == 1 and kw == 1:
        xs = x[:, ::stride, ::stride, :] if stride > 1 else x
        N, Ho, Wo, Cin = xs.shape
        a = xs.reshape(N * Ho * Wo, Cin)        # no im2col for 1x1 convs
    else:
        # TODO(synk): 7x7 stem and the three stride-2 3x3 convs still use
        # im2col (bf16 patches); a halo-DMA direct kernel would remove it.
        a, (N, Ho, Wo) = _im2col(x, kh, kw, stride, pad)
    idm = None if identity is None else identity.reshape(-1, cp["cout"])
    y = gemm_bias_act(a, cp["w"], cp["b"], relu=relu, n_valid=cp["cout"],
                      identity=idm, out_dtype=jnp.bfloat16)
    return y.reshape(N, Ho, Wo, cp["cout"])


# --------------------------- parameter construction --------------------------

def _make_conv(key, cout, cin, kh, kw, stride, pad):
    """Random conv + BN params, folded & pre-packed for its kernel path."""
    k1, k2, k3 = jax.random.split(key, 3)
    fan_in = cin * kh * kw
    w = jax.random.normal(k1, (cout, cin, kh, kw), jnp.float32) * jnp.sqrt(
        2.0 / fan_in)
    gamma = 1.0 + 0.1 * jax.random.normal(k2, (cout,), jnp.float32)
    beta = 0.1 * jax.random.normal(k3, (cout,), jnp.float32)
    running_mean = jnp.zeros((cout,), jnp.float32)
    running_var = jnp.ones((cout,), jnp.float32)
    scale = gamma / jnp.sqrt(running_var + EPS)       # folded BN (inference)
    bias = beta - running_mean * scale

    wm = jnp.transpose(w, (2, 3, 1, 0)).reshape(kh * kw * cin, cout)
    wm = wm * scale[None, :]                          # fold scale into weights

    direct = (kh == 3 and kw == 3 and stride == 1)
    cp = dict(kh=kh, kw=kw, stride=stride, pad=pad, cout=cout, cin=cin,
              kind="direct" if direct else "gemm")
    if direct:
        cp["w"] = wm.astype(jnp.bfloat16)                           # (9*Cin, Cout)
        cp["b"] = bias.reshape(1, cout).astype(jnp.float32)
    else:
        K = kh * kw * cin
        bk = _pick_block(K, TK)
        bn = _pick_block(cout, TN)
        Kp, Np = _round_up(K, bk), _round_up(cout, bn)
        cp["w"] = (jnp.zeros((Kp, Np), jnp.float32)
                   .at[:K, :cout].set(wm).astype(jnp.bfloat16))     # cached, padded
        cp["b"] = jnp.zeros((1, Np), jnp.float32).at[0, :cout].set(bias)
    return cp


def _bottleneck_params(key, cin, planes, stride, downsample):
    ks = jax.random.split(key, 4)
    p = {
        "conv1": _make_conv(ks[0], planes, cin, 1, 1, 1, 0),
        "conv2": _make_conv(ks[1], planes, planes, 3, 3, stride, 1),
        "conv3": _make_conv(ks[2], planes * 4, planes, 1, 1, 1, 0),
    }
    if downsample:
        p["down"] = _make_conv(ks[3], planes * 4, cin, 1, 1, stride, 0)
    return p


def init_params(key):
    keys = jax.random.split(key, 4)
    params = {"conv1": _make_conv(keys[0], 64, 3, 7, 7, 2, 3)}

    cfg = [(64, 3, 1), (128, 4, 2), (256, 6, 2), (512, 3, 2)]  # ResNet-50
    cin = 64
    layers = []
    lkeys = jax.random.split(keys[1], len(cfg))
    for li, (planes, nblocks, stride) in enumerate(cfg):
        bkeys = jax.random.split(lkeys[li], nblocks)
        blocks = []
        for bi in range(nblocks):
            s = stride if bi == 0 else 1
            ds = (bi == 0)
            blocks.append(_bottleneck_params(bkeys[bi], cin, planes, s, ds))
            cin = planes * 4
        layers.append(blocks)
    params["layers"] = layers

    kw_, kb_ = jax.random.split(keys[2])
    fc_w = jax.random.normal(kw_, (NCLASSES, 2048), jnp.float32) / jnp.sqrt(2048.0)
    fc_b = 0.01 * jax.random.normal(kb_, (NCLASSES,), jnp.float32)
    K = 2048
    bk = _pick_block(K, TK)
    bn = _pick_block(NCLASSES, TN)
    Kp, Np = _round_up(K, bk), _round_up(NCLASSES, bn)
    params["fc"] = {
        "w": (jnp.zeros((Kp, Np), jnp.float32)
              .at[:K, :NCLASSES].set(fc_w.T).astype(jnp.bfloat16)),
        "b": jnp.zeros((1, Np), jnp.float32).at[0, :NCLASSES].set(fc_b),
    }
    return params


# --------------------------------- forward -----------------------------------

def bottleneck_fwd(x, p):
    out = conv_bn(x, p["conv1"], relu=True)
    out = conv_bn(out, p["conv2"], relu=True)
    if "down" in p:
        identity = conv_bn(x, p["down"], relu=False)
    else:
        identity = x
    # conv3: residual add + ReLU fused into the GEMM epilogue.
    return conv_bn(out, p["conv3"], identity=identity, relu=True)


def net_forward(x_nchw, params):
    # Accepts NCHW (PyTorch convention); computes internally in NHWC / bf16.
    x = jnp.transpose(x_nchw, (0, 2, 3, 1)).astype(jnp.bfloat16)

    x = conv_bn(x, params["conv1"], relu=True)
    x = maxpool(x, 3, 2, 1)

    for blocks in params["layers"]:
        for bp in blocks:
            x = bottleneck_fwd(x, bp)

    feat = jnp.mean(x.astype(jnp.float32), axis=(1, 2))  # (N, 2048)

    # TODO(synk): Dropout(0.8) uses eval/inference semantics (identity) here.
    logits = gemm_bias_act(feat, params["fc"]["w"], params["fc"]["b"],
                           relu=False, n_valid=NCLASSES, identity=None,
                           out_dtype=jnp.float32)
    return logits


if __name__ == "__main__":
    key = jax.random.PRNGKey(0)
    pkey, xkey = jax.random.split(key)
    params = init_params(pkey)

    # Small but structurally valid input: batch=2, 3 channels, 32x32 spatial.
    x = jax.random.normal(xkey, (2, 3, 32, 32), jnp.float32)

    fwd = jax.jit(lambda xx: net_forward(xx, params))
    out = jax.block_until_ready(fwd(x))
    assert out.shape == (2, NCLASSES), out.shape
    assert bool(jnp.all(jnp.isfinite(out)))
    print("KERNEL_OK")
</pallas_src>

<mosaic_0001>
module attributes {stable_mosaic.version = 11 : i64} {
  func.func @_gemm_kernel(%arg0: i32, %arg1: i32, %arg2: i32, %arg3: memref<128x256xbf16, #tpu.memory_space<vmem>>, %arg4: memref<256x128xbf16, #tpu.memory_space<vmem>>, %arg5: memref<1x128xf32, #tpu.memory_space<vmem>>, %arg6: memref<128x128xbf16, #tpu.memory_space<vmem>>, %arg7: memref<128x128xf32, #tpu.memory_space<vmem>>) attributes {dimension_semantics = [#tpu.dimension_semantics<parallel>, #tpu.dimension_semantics<parallel>, #tpu.dimension_semantics<arbitrary>], iteration_bounds = array<i64: 4, 1, 1>, scalar_prefetch = 0 : i64, scratch_operands = 1 : i64, tpu.core_type = #tpu.core_type<tc>, window_params = [{transform_indices = @transform_0, window_bounds = array<i64: 128, 256>}, {transform_indices = @transform_1, window_bounds = array<i64: 256, 128>}, {transform_indices = @transform_2, window_bounds = array<i64: 1, 128>}, {transform_indices = @transform_3, window_bounds = array<i64: 128, 128>}]} {
    %c0_i32 = arith.constant 0 : i32
    %0 = arith.cmpi eq, %arg2, %c0_i32 : i32
    %1 = arith.extui %0 : i1 to i32
    %c0_i32_0 = arith.constant 0 : i32
    %2 = arith.cmpi ne, %1, %c0_i32_0 : i32
    scf.if %2 {
      %cst_10 = arith.constant 0.000000e+00 : f32
      %12 = vector.broadcast %cst_10 : f32 to vector<128x128xf32>
      %c0_11 = arith.constant 0 : index
      %c0_12 = arith.constant 0 : index
      %13 = vector.load %arg7[%c0_11, %c0_12] : memref<128x128xf32, #tpu.memory_space<vmem>>, vector<128x128xf32>
      tpu.vector_store %arg7[%c0_11, %c0_12], %12 {strides = array<i32>} : memref<128x128xf32, #tpu.memory_space<vmem>>, vector<128x128xf32>,
    } else {
    }
    %c0 = arith.constant 0 : index
    %c0_1 = arith.constant 0 : index
    %3 = vector.load %arg7[%c0, %c0_1] : memref<128x128xf32, #tpu.memory_space<vmem>>, vector<128x128xf32>
    %c0_2 = arith.constant 0 : index
    %c0_3 = arith.constant 0 : index
    %4 = vector.load %arg3[%c0_2, %c0_3] : memref<128x256xbf16, #tpu.memory_space<vmem>>, vector<128x256xbf16>
    %c0_4 = arith.constant 0 : index
    %c0_5 = arith.constant 0 : index
    %5 = vector.load %arg4[%c0_4, %c0_5] : memref<256x128xbf16, #tpu.memory_space<vmem>>, vector<256x128xbf16>
    %cst = arith.constant dense<0.000000e+00> : vector<128x128xf32>
    %6 = tpu.matmul %4, %5, %cst {dimension_numbers = #tpu.dot_dimension_numbers<[1], [0], [0], [1], [0, 0, 1, 1], [], []>} : vector<128x256xbf16>, vector<256x128xbf16>, vector<128x128xf32> -> vector<128x128xf32>
    %7 = arith.addf %3, %6 : vector<128x128xf32>
    %c0_6 = arith.constant 0 : index
    %c0_7 = arith.constant 0 : index
    %8 = vector.load %arg7[%c0_6, %c0_7] : memref<128x128xf32, #tpu.memory_space<vmem>>, vector<128x128xf32>
    tpu.vector_store %arg7[%c0_6, %c0_7], %7 {strides = array<i32>} : memref<128x128xf32, #tpu.memory_space<vmem>>, vector<128x128xf32>,
    %c0_i32_8 = arith.constant 0 : i32
    %9 = arith.cmpi eq, %arg2, %c0_i32_8 : i32
    %10 = arith.extui %9 : i1 to i32
    %c0_i32_9 = arith.constant 0 : i32
    %11 = arith.cmpi ne, %10, %c0_i32_9 : i32
    scf.if %11 {
      %c0_10 = arith.constant 0 : index
      %c0_11 = arith.constant 0 : index
      %12 = vector.load %arg7[%c0_10, %c0_11] : memref<128x128xf32, #tpu.memory_space<vmem>>, vector<128x128xf32>
      %c0_12 = arith.constant 0 : index
      %c0_13 = arith.constant 0 : index
      %13 = vector.load %arg5[%c0_12, %c0_13] : memref<1x128xf32, #tpu.memory_space<vmem>>, vector<1x128xf32>
      %14 = vector.broadcast %13 : vector<1x128xf32> to vector<128x128xf32>
      %15 = arith.addf %12, %14 : vector<128x128xf32>
      %cst_14 = arith.constant 0.000000e+00 : f32
      %16 = vector.broadcast %cst_14 : f32 to vector<128x128xf32>
      %17 = arith.maximumf %15, %16 : vector<128x128xf32>
      %18 = arith.truncf %17 : vector<128x128xf32> to vector<128x128xbf16>
      %c0_15 = arith.constant 0 : index
      %c0_16 = arith.constant 0 : index
      %19 = vector.load %arg6[%c0_15, %c0_16] : memref<128x128xbf16, #tpu.memory_space<vmem>>, vector<128x128xbf16>
      tpu.vector_store %arg6[%c0_15, %c0_16], %18 {strides = array<i32>} : memref<128x128xbf16, #tpu.memory_space<vmem>>, vector<128x128xbf16>,
    } else {
    }
    return
  }
  func.func @transform_0(%arg0: i32, %arg1: i32, %arg2: i32) -> (i32, i32) {
    %c0_i32 = arith.constant 0 : i32
    return %arg0, %arg2 : i32, i32
  }
  func.func @transform_1(%arg0: i32, %arg1: i32, %arg2: i32) -> (i32, i32) {
    %c0_i32 = arith.constant 0 : i32
    return %arg2, %arg1 : i32, i32
  }
  func.func @transform_2(%arg0: i32, %arg1: i32, %arg2: i32) -> (i32, i32) {
    %c0_i32 = arith.constant 0 : i32
    %c0_i32_0 = arith.constant 0 : i32
    return %c0_i32, %arg1 : i32, i32
  }
  func.func @transform_3(%arg0: i32, %arg1: i32, %arg2: i32) -> (i32, i32) {
    %c0_i32 = arith.constant 0 : i32
    return %arg0, %arg1 : i32, i32
  }
}

</mosaic_0001>

<llo_original>
// kernel: tpu_custom_call.1
$region0: #{tpu_custom_call.1}
  #allocation0 [shape = 'u32[]', space=smem, size = 0x4, offset = 0x4, fixed_abs, tag = 'smem constant byte address 0x4 - core index']
  #allocation1 [shape = 'u32[72,128]{1,0:T(1,128)}', space=vmem, size = 0x9000, scoped, tag = 'internal scratch']
  #allocation2 [shape = 'f32[128,128]{1,0:T(8,128)}', space=vmem, size = 0x10000, scoped, tag = 'scratch operand']
  %s0 = inlined_call_operand.hbm [shape: bf16[512,256], index: 0, kind: input, shape index: {}]
  %s1 = inlined_call_operand.hbm [shape: bf16[256,128], index: 1, kind: input, shape index: {}]
  %s2 = inlined_call_operand.vmem [shape: f32[1,128], index: 2, kind: input, shape index: {}]
  %s3 = inlined_call_operand.hbm [shape: bf16[512,128], index: 3, kind: output, shape index: {}]
  %s4 = sld [smem:[#allocation0]]
  $region61: #{tpu_custom_call.1} parent=0
    _
  %s6 = ssub.s32 1, %s4
  %s7 = scalar_select 0, %s6, %s4
  $region1: #{tpu_custom_call.1} parent=0
    #allocation3 [shape = 'u8[131072]{0}', space=vmem, size = 0x20000, scoped, tag = 'input window, operand 0']
    #allocation4 [shape = 's32[2]{0}', space=sflag, size = 0x8, scoped, tag = 'scoped memory for tpu_custom_call.1']
    #allocation5 [shape = 's32[2]{0}', space=sflag, size = 0x8, scoped, tag = 'scoped memory for tpu_custom_call.1']
    #allocation6 [shape = 'u8[65536]{0}', space=vmem, size = 0x10000, scoped, tag = 'input window, operand 1, single buffered']
    #allocation7 [shape = 's32[1]{0}', space=sflag, size = 0x4, scoped, tag = 'scoped memory for tpu_custom_call.1']
    #allocation8 [shape = 'u8[65536]{0}', space=vmem, size = 0x10000, scoped, tag = 'output window, operand 0']
    %8 = vsyncpa [#allocation4], 0
    %s9 = scalar_lea.sflag [#allocation4], 1
    %10 = vsyncpa %s9, 0
    %11 = vsyncpa [#allocation7], 0
    %12 = vsyncpa [#allocation5], 0
    %s13 = scalar_lea.sflag [#allocation5], 1
    %14 = vsyncpa %s13, 0
    loop: start=0, step=1, limit=6
    $region2: #{tpu_custom_call.1} parent=1 // loop_pre_header
      _
    $region3: #{tpu_custom_call.1} parent=1 // loop_header
      %s16 = sphi 0, %s20
      %p17 = scmp.ge.s32.totalorder %s16, 6
      %s23 = sphi 0, %s42
      %s24 = sphi 0, %s38
      %s25 = sphi 0, %s34
      %s26 = sphi 0, %s23
      %s27 = sphi 0, %s24
      %s28 = sphi 0, %s25
      %s29 = sphi 0, %s26
      %s30 = sphi 0, %s27
      %s31 = sphi 0, %s28
      %s47 = sphi 0, %s49
      %s50 = sphi 0, %s47
      %s51 = sphi 0, %s50
      %s67 = sphi 0, %s51
      %s75 = sphi 0, %s77
      %s78 = sphi 0, %s75
      %s79 = sphi 0, %s78
      %s95 = sphi 0, %s79
      %s101 = sphi 0, %s103
      %s104 = sphi 0, %s101
      %s105 = sphi 0, %s104
      %s121 = sphi 0, %s105
      %s129 = sphi 0, %s131
      %s132 = sphi 0, %s129
      %s133 = sphi 0, %s132
      %s149 = sphi 0, %s133
    $region4: #{tpu_custom_call.1} parent=1 // loop_header_branch
      %19 = sbr.rel (%p17) target = $region8
    $region5: #{tpu_custom_call.1} parent=1 // loop_body
      %s21 = ssub.s32 %s16, 1
      %s22 = ssub.s32 %s16, 2
      %s32 = sadd.s32 1, %s25
      %p33 = scmp.ge.s32.totalorder %s32, 1
      %s34 = scalar_select %p33, 0, %s32
      %s35 = sadd.s32 1, %s24
      %s36 = scalar_select %p33, %s35, %s24
      %p37 = scmp.ge.s32.totalorder %s36, 1
      %s38 = scalar_select %p37, 0, %s36
      %s39 = sadd.s32 1, %s23
      %s40 = scalar_select %p37, %s39, %s23
      %p41 = scmp.ge.s32.totalorder %s40, 4
      %s42 = scalar_select %p41, 0, %s40
      %s43 = ssub.s32 %s23, %s42
      %s44 = ssub.s32 %s25, %s34
      %s45 = sor.u32 %s43, %s44
      %p46 = scmp.eq.s32.totalorder %s45, 0
      %s48 = sadd.s32 %s47, 1
      %s49 = scalar_select %p46, %s47, %s48
      %p52 = pneg %p46
      %p53 = scmp.eq.s32.totalorder %s16, 3
      %p54 = por %p52, %p53
      %p55 = scmp.ne.s32.totalorder %s47, %s50
      %p56 = scmp.eq.s32.totalorder %s16, 0
      %p57 = por %p55, %p56
      %p58 = scmp.ne.s32.totalorder %s47, %s50
      %p59 = scmp.eq.s32.totalorder %s21, 3
      %p60 = por %p58, %p59
      %p61 = scmp.ne.s32.totalorder %s50, %s51
      %p62 = scmp.eq.s32.totalorder %s21, 0
      %p63 = por %p61, %p62
      %p64 = scmp.ne.s32.totalorder %s50, %s51
      %p65 = scmp.eq.s32.totalorder %s22, 3
      %p66 = por %p64, %p65
      %p68 = scmp.ne.s32.totalorder %s51, %s67
      %p69 = scmp.eq.s32.totalorder %s22, 0
      %p70 = por %p68, %p69
      %s71 = ssub.s32 %s25, %s34
      %s72 = ssub.s32 %s24, %s38
      %s73 = sor.u32 %s71, %s72
      %p74 = scmp.eq.s32.totalorder %s73, 0
      %s76 = sadd.s32 %s75, 1
      %s77 = scalar_select %p74, %s75, %s76
      %p80 = pneg %p74
      %p81 = scmp.eq.s32.totalorder %s16, 3
      %p82 = por %p80, %p81
      %p83 = scmp.ne.s32.totalorder %s75, %s78
      %p84 = scmp.eq.s32.totalorder %s16, 0
      %p85 = por %p83, %p84
      %p86 = scmp.ne.s32.totalorder %s75, %s78
      %p87 = scmp.eq.s32.totalorder %s21, 3
      %p88 = por %p86, %p87
      %p89 = scmp.ne.s32.totalorder %s78, %s79
      %p90 = scmp.eq.s32.totalorder %s21, 0
      %p91 = por %p89, %p90
      %p92 = scmp.ne.s32.totalorder %s78, %s79
      %p93 = scmp.eq.s32.totalorder %s22, 3
      %p94 = por %p92, %p93
      %p96 = scmp.ne.s32.totalorder %s79, %s95
      %p97 = scmp.eq.s32.totalorder %s22, 0
      %p98 = por %p96, %p97
      %s99 = ssub.s32 %s24, %s38
      %p100 = scmp.eq.s32.totalorder %s99, 0
      %s102 = sadd.s32 %s101, 1
      %s103 = scalar_select %p100, %s101, %s102
      %p106 = pneg %p100
      %p107 = scmp.eq.s32.totalorder %s16, 3
      %p108 = por %p106, %p107
      %p109 = scmp.ne.s32.totalorder %s101, %s104
      %p110 = scmp.eq.s32.totalorder %s16, 0
      %p111 = por %p109, %p110
      %p112 = scmp.ne.s32.totalorder %s101, %s104
      %p113 = scmp.eq.s32.totalorder %s21, 3
      %p114 = por %p112, %p113
      %p115 = scmp.ne.s32.totalorder %s104, %s105
      %p116 = scmp.eq.s32.totalorder %s21, 0
      %p117 = por %p115, %p116
      %p118 = scmp.ne.s32.totalorder %s104, %s105
      %p119 = scmp.eq.s32.totalorder %s22, 3
      %p120 = por %p118, %p119
      %p122 = scmp.ne.s32.totalorder %s105, %s121
      %p123 = scmp.eq.s32.totalorder %s22, 0
      %p124 = por %p122, %p123
      %s125 = ssub.s32 %s23, %s42
      %s126 = ssub.s32 %s24, %s38
      %s127 = sor.u32 %s125, %s126
      %p128 = scmp.eq.s32.totalorder %s127, 0
      %s130 = sadd.s32 %s129, 1
      %s131 = scalar_select %p128, %s129, %s130
      %p134 = pneg %p128
      %p135 = scmp.eq.s32.totalorder %s16, 3
      %p136 = por %p134, %p135
      %p137 = scmp.ne.s32.totalorder %s129, %s132
      %p138 = scmp.eq.s32.totalorder %s16, 0
      %p139 = por %p137, %p138
      %p140 = scmp.ne.s32.totalorder %s129, %s132
      %p141 = scmp.eq.s32.totalorder %s21, 3
      %p142 = por %p140, %p141
      %p143 = scmp.ne.s32.totalorder %s132, %s133
      %p144 = scmp.eq.s32.totalorder %s21, 0
      %p145 = por %p143, %p144
      %p146 = scmp.ne.s32.totalorder %s132, %s133
      %p147 = scmp.eq.s32.totalorder %s22, 3
      %p148 = por %p146, %p147
      %p150 = scmp.ne.s32.totalorder %s133, %s149
      %p151 = scmp.eq.s32.totalorder %s22, 0
      %p152 = por %p150, %p151
      %p153 = scmp.le.s32.totalorder 1, %s16
      %p154 = scmp.lt.s32.totalorder %s16, 5
      %p155 = pnand %p153, %p154
      %p156 = pneg %p155
      // Predicated region
      $region9: #{tpu_custom_call.1} parent=5 // pred_check
        _
      $region10: #{tpu_custom_call.1} parent=5 // pred_check_branch
        %158 = sbr.rel (%p155) target = $region12
      $region11: #{tpu_custom_call.1} parent=5 // pred_region
        %s159 = ssub.s32 %s16, 1
        // Predicated region
        $region13: #{tpu_custom_call.1} parent=11 // pred_check
          %p160 = pneg %p91
        $region14: #{tpu_custom_call.1} parent=11 // pred_check_branch
          %162 = sbr.rel (%p160) target = $region16
        $region15: #{tpu_custom_call.1} parent=11 // pred_region
          %s163 = smul.u32 32, %s28
          %165 = vsyncadd [#allocation7], 0
          %s166 = sadd.s32 %s27, %s163
          %s167 = smul.addr %s166, 4
          %s168 = scalar_lea.hbm %s1, %s167
          %s169 = sshll.u32 %s168, 4
          %s170 = int_to_ptr.hbm [resolvable:$true] %s169
          %s171 = sshll.u32 [#allocation6], 4
          %s172 = int_to_ptr.vmem [resolvable:$true] %s171
          %177 = dma.hbm_to_vmem [thread:$0]  %s170, 2048, %s172, [#allocation7], 64, 64, 4
        $region16: #{tpu_custom_call.1} parent=11 // pred_fallthru
          _
        // Predicated region
        $region17: #{tpu_custom_call.1} parent=11 // pred_check
          %p178 = pneg %p117
        $region18: #{tpu_custom_call.1} parent=11 // pred_check_branch
          %180 = sbr.rel (%p178) target = $region20
        $region19: #{tpu_custom_call.1} parent=11 // pred_region
          %p181 = scmp.lt.s32.totalorder %s27, 0
          %s182 = scalar_select %p181, %s27, 0
          %s183 = scalar_lea.vmem %s2, %s182
        $region20: #{tpu_custom_call.1} parent=11 // pred_fallthru
          _
      $region12: #{tpu_custom_call.1} parent=5 // pred_fallthru
        _
      %p184 = scmp.lt.s32.totalorder %s16, 4
      // Predicated region
      $region21: #{tpu_custom_call.1} parent=5 // pred_check
        %p185 = pneg %p184
      $region22: #{tpu_custom_call.1} parent=5 // pred_check_branch
        %187 = sbr.rel (%p185) target = $region24
      $region23: #{tpu_custom_call.1} parent=5 // pred_region
        // Predicated region
        $region25: #{tpu_custom_call.1} parent=23 // pred_check
          %p188 = pneg %p57
        $region26: #{tpu_custom_call.1} parent=23 // pred_check_branch
          %190 = sbr.rel (%p188) target = $region28
        $region27: #{tpu_custom_call.1} parent=23 // pred_region
          %s191 = sand.u32 %s47, 1
          %s192 = scalar_lea.sflag [#allocation4], %s191
          %s193 = sand.u32 %s47, 1
          %s194 = smul.addr %s193, 128
          %s195 = scalar_lea.vmem [#allocation3], %s194
          %s196 = smul.u32 16, %s23
          %s197 = smul.u32 2, %s25
          %199 = vsyncadd %s192, 0
          %s200 = smul.addr %s196, 2
          %s201 = sadd.s32 %s197, %s200
          %s202 = smul.addr %s201, 4
          %s203 = scalar_lea.hbm %s0, %s202
          %s204 = sshll.u32 %s203, 4
          %s205 = int_to_ptr.hbm [resolvable:$true] %s204
          %s206 = sshll.u32 %s195, 4
          %s207 = int_to_ptr.vmem [resolvable:$true] %s206
          %212 = dma.hbm_to_vmem [thread:$0]  %s205, 2048, %s207, %s192, 128, 128, 8
        $region28: #{tpu_custom_call.1} parent=23 // pred_fallthru
          _
      $region24: #{tpu_custom_call.1} parent=5 // pred_fallthru
        _
      %p213 = scmp.le.s32.totalorder 1, %s16
      %p214 = scmp.lt.s32.totalorder %s16, 5
      %p215 = pnand %p213, %p214
      %p216 = pneg %p215
      // Predicated region
      $region29: #{tpu_custom_call.1} parent=5 // pred_check
        _
      $region30: #{tpu_custom_call.1} parent=5 // pred_check_branch
        %218 = sbr.rel (%p215) target = $region32
      $region31: #{tpu_custom_call.1} parent=5 // pred_region
        %s219 = ssub.s32 %s16, 1
        %s220 = sand.u32 %s50, 1
        %s221 = scalar_lea.sflag [#allocation4], %s220
        %s222 = sand.u32 %s50, 1
        %s223 = smul.addr %s222, 128
        %s224 = scalar_lea.vmem [#allocation3], %s223
        // Predicated region
        $region33: #{tpu_custom_call.1} parent=31 // pred_check
          %p225 = pneg %p63
        $region34: #{tpu_custom_call.1} parent=31 // pred_check_branch
          %227 = sbr.rel (%p225) target = $region36
        $region35: #{tpu_custom_call.1} parent=31 // pred_region
          %229 = dma.done %s221, 2048
        $region36: #{tpu_custom_call.1} parent=31 // pred_fallthru
          _
        // Predicated region
        $region37: #{tpu_custom_call.1} parent=31 // pred_check
          %p230 = pneg %p91
        $region38: #{tpu_custom_call.1} parent=31 // pred_check_branch
          %232 = sbr.rel (%p230) target = $region40
        $region39: #{tpu_custom_call.1} parent=31 // pred_region
          %234 = dma.done [#allocation7], 2048
        $region40: #{tpu_custom_call.1} parent=31 // pred_fallthru
          _
        %s235 = sand.u32 %s50, 1
        %s236 = scalar_lea.sflag [#allocation4], %s235
        %s237 = sand.u32 %s50, 1
        %s238 = smul.addr %s237, 128
        %s239 = scalar_lea.vmem [#allocation3], %s238
        %p240 = pneg %p63
        %p241 = pneg %p60
        %p242 = pneg %p91
        %p243 = pneg %p88
        %p244 = scmp.lt.s32.totalorder %s27, 0
        %s245 = scalar_select %p244, %s27, 0
        %s246 = scalar_lea.vmem %s2, %s245
        %p247 = pneg %p117
        %p248 = pneg %p114
        %p249 = pneg %p145
        %p250 = pneg %p142
        %s251 = sand.u32 %s132, 1
        %s252 = scalar_lea.sflag [#allocation5], %s251
        %s253 = sand.u32 %s132, 1
        %s254 = smul.addr %s253, 64
        %s255 = scalar_lea.vmem [#allocation8], %s254
        %s256 = smul.u32 16, %s26
        %s257 = smul.u32 2, %s28
        %s258 = smul.u32 32, %s28
        %p259 = scmp.lt.s32.totalorder %s27, 0
        %s260 = scalar_select %p259, %s27, 0
        %s261 = scalar_lea.vmem %s2, %s260
        %s262 = smul.u32 16, %s26
        %p263 = scmp.eq.s32.totalorder %s28, 0
        // Predicated region
        $region41: #{tpu_custom_call.1} parent=31 // pred_check
          %p264 = pneg %p263
        $region42: #{tpu_custom_call.1} parent=31 // pred_check_branch
          %266 = sbr.rel (%p264) target = $region44
        $region43: #{tpu_custom_call.1} parent=31 // pred_region
          %267 = vst [vmem:[#allocation2] sm:$0xff] 0.0
          %268 = vst [vmem:[#allocation2 + $0x8] sm:$0xff] 0.0
          %269 = vst [vmem:[#allocation2 + $0x10] sm:$0xff] 0.0
          %270 = vst [vmem:[#allocation2 + $0x18] sm:$0xff] 0.0
          %271 = vst [vmem:[#allocation2 + $0x20] sm:$0xff] 0.0
          %272 = vst [vmem:[#allocation2 + $0x28] sm:$0xff] 0.0
          %273 = vst [vmem:[#allocation2 + $0x30] sm:$0xff] 0.0
          %274 = vst [vmem:[#allocation2 + $0x38] sm:$0xff] 0.0
          %275 = vst [vmem:[#allocation2 + $0x40] sm:$0xff] 0.0
          %276 = vst [vmem:[#allocation2 + $0x48] sm:$0xff] 0.0
          %277 = vst [vmem:[#allocation2 + $0x50] sm:$0xff] 0.0
          %278 = vst [vmem:[#allocation2 + $0x58] sm:$0xff] 0.0
          %279 = vst [vmem:[#allocation2 + $0x60] sm:$0xff] 0.0
          %280 = vst [vmem:[#allocation2 + $0x68] sm:$0xff] 0.0
          %281 = vst [vmem:[#allocation2 + $0x70] sm:$0xff] 0.0
          %282 = vst [vmem:[#allocation2 + $0x78] sm:$0xff] 0.0
        $region44: #{tpu_custom_call.1} parent=31 // pred_fallthru
          _
        %v283 = vld [vmem:[#allocation2] sm:$0xff]
        %v284 = vld [vmem:[#allocation2 + $0x8] sm:$0xff]
        %v285 = vld [vmem:[#allocation2 + $0x10] sm:$0xff]
        %v286 = vld [vmem:[#allocation2 + $0x18] sm:$0xff]
        %v287 = vld [vmem:[#allocation2 + $0x20] sm:$0xff]
        %v288 = vld [vmem:[#allocation2 + $0x28] sm:$0xff]
        %v289 = vld [vmem:[#allocation2 + $0x30] sm:$0xff]
        %v290 = vld [vmem:[#allocation2 + $0x38] sm:$0xff]
        %v291 = vld [vmem:[#allocation2 + $0x40] sm:$0xff]
        %v292 = vld [vmem:[#allocation2 + $0x48] sm:$0xff]
        %v293 = vld [vmem:[#allocation2 + $0x50] sm:$0xff]
        %v294 = vld [vmem:[#allocation2 + $0x58] sm:$0xff]
        %v295 = vld [vmem:[#allocation2 + $0x60] sm:$0xff]
        %v296 = vld [vmem:[#allocation2 + $0x68] sm:$0xff]
        %v297 = vld [vmem:[#allocation2 + $0x70] sm:$0xff]
        %v298 = vld [vmem:[#allocation2 + $0x78] sm:$0xff]
        %v299 = vld [vmem:[%s224] sm:$0xff]
        %v300 = vld [vmem:[%s224 + $0x8] sm:$0xff]
        %v301 = vld [vmem:[%s224 + $0x10] sm:$0xff]
        %v302 = vld [vmem:[%s224 + $0x18] sm:$0xff]
        %v303 = vld [vmem:[%s224 + $0x20] sm:$0xff]
        %v304 = vld [vmem:[%s224 + $0x28] sm:$0xff]
        %v305 = vld [vmem:[%s224 + $0x30] sm:$0xff]
        %v306 = vld [vmem:[%s224 + $0x38] sm:$0xff]
        %v307 = vld [vmem:[%s224 + $0x40] sm:$0xff]
        %v308 = vld [vmem:[%s224 + $0x48] sm:$0xff]
        %v309 = vld [vmem:[%s224 + $0x50] sm:$0xff]
        %v310 = vld [vmem:[%s224 + $0x58] sm:$0xff]
        %v311 = vld [vmem:[%s224 + $0x60] sm:$0xff]
        %v312 = vld [vmem:[%s224 + $0x68] sm:$0xff]
        %v313 = vld [vmem:[%s224 + $0x70] sm:$0xff]
        %v314 = vld [vmem:[%s224 + $0x78] sm:$0xff]
        %v315 = vld [vmem:[#allocation6] sm:$0xf]
        %v316 = vld [vmem:[#allocation6 + $0x4] sm:$0xf]
        %v317 = vld [vmem:[#allocation6 + $0x8] sm:$0xf]
        %v318 = vld [vmem:[#allocation6 + $0xc] sm:$0xf]
        %v319 = vld [vmem:[#allocation6 + $0x10] sm:$0xf]
        %v320 = vld [vmem:[#allocation6 + $0x14] sm:$0xf]
        %v321 = vld [vmem:[#allocation6 + $0x18] sm:$0xf]
        %v322 = vld [vmem:[#allocation6 + $0x1c] sm:$0xf]
        %v323 = vld [vmem:[#allocation6 + $0x20] sm:$0xf]
        %v324 = vld [vmem:[#allocation6 + $0x24] sm:$0xf]
        %v325 = vld [vmem:[#allocation6 + $0x28] sm:$0xf]
        %v326 = vld [vmem:[#allocation6 + $0x2c] sm:$0xf]
        %v327 = vld [vmem:[#allocation6 + $0x30] sm:$0xf]
        %v328 = vld [vmem:[#allocation6 + $0x34] sm:$0xf]
        %v329 = vld [vmem:[#allocation6 + $0x38] sm:$0xf]
        %v330 = vld [vmem:[#allocation6 + $0x3c] sm:$0xf]
        %v331 = vld [vmem:[#allocation6 + $0x40] sm:$0xf]
        %v332 = vld [vmem:[#allocation6 + $0x44] sm:$0xf]
        %v333 = vld [vmem:[#allocation6 + $0x48] sm:$0xf]
        %v334 = vld [vmem:[#allocation6 + $0x4c] sm:$0xf]
        %v335 = vld [vmem:[#allocation6 + $0x50] sm:$0xf]
        %v336 = vld [vmem:[#allocation6 + $0x54] sm:$0xf]
        %v337 = vld [vmem:[#allocation6 + $0x58] sm:$0xf]
        %v338 = vld [vmem:[#allocation6 + $0x5c] sm:$0xf]
        %v339 = vld [vmem:[#allocation6 + $0x60] sm:$0xf]
        %v340 = vld [vmem:[#allocation6 + $0x64] sm:$0xf]
        %v341 = vld [vmem:[#allocation6 + $0x68] sm:$0xf]
        %v342 = vld [vmem:[#allocation6 + $0x6c] sm:$0xf]
        %v343 = vld [vmem:[#allocation6 + $0x70] sm:$0xf]
        %v344 = vld [vmem:[#allocation6 + $0x74] sm:$0xf]
        %v345 = vld [vmem:[#allocation6 + $0x78] sm:$0xf]
        %v346 = vld [vmem:[#allocation6 + $0x7c] sm:$0xf]
        %v363 = vunpack.c.l.b16 %v299
        %v364 = vunpack.c.h.b16 %v299
        %v365 = vunpack.c.l.b16 %v300
        %v366 = vunpack.c.h.b16 %v300
        %v367 = vunpack.c.l.b16 %v301
        %v368 = vunpack.c.h.b16 %v301
        %v369 = vunpack.c.l.b16 %v302
        %v370 = vunpack.c.h.b16 %v302
        %v371 = vunpack.c.l.b16 %v303
        %v372 = vunpack.c.h.b16 %v303
        %v373 = vunpack.c.l.b16 %v304
        %v374 = vunpack.c.h.b16 %v304
        %v375 = vunpack.c.l.b16 %v305
        %v376 = vunpack.c.h.b16 %v305
        %v377 = vunpack.c.l.b16 %v306
        %v378 = vunpack.c.h.b16 %v306
        %v379 = vunpack.c.l.b16 %v307
        %v380 = vunpack.c.h.b16 %v307
        %v381 = vunpack.c.l.b16 %v308
        %v382 = vunpack.c.h.b16 %v308
        %v383 = vunpack.c.l.b16 %v309
        %v384 = vunpack.c.h.b16 %v309
        %v385 = vunpack.c.l.b16 %v310
        %v386 = vunpack.c.h.b16 %v310
        %v387 = vunpack.c.l.b16 %v311
        %v388 = vunpack.c.h.b16 %v311
        %v389 = vunpack.c.l.b16 %v312
        %v390 = vunpack.c.h.b16 %v312
        %v391 = vunpack.c.l.b16 %v313
        %v392 = vunpack.c.h.b16 %v313
        %v393 = vunpack.c.l.b16 %v314
        %v394 = vunpack.c.h.b16 %v314
        %v395 = vpack.c.b16 %v365, %v363
        %v396 = vpack.c.b16 %v366, %v364
        %v397 = vpack.c.b16 %v369, %v367
        %v398 = vpack.c.b16 %v370, %v368
        %v399 = vpack.c.b16 %v373, %v371
        %v400 = vpack.c.b16 %v374, %v372
        %v401 = vpack.c.b16 %v377, %v375
        %v402 = vpack.c.b16 %v378, %v376
        %v403 = vpack.c.b16 %v381, %v379
        %v404 = vpack.c.b16 %v382, %v380
        %v405 = vpack.c.b16 %v385, %v383
        %v406 = vpack.c.b16 %v386, %v384
        %v407 = vpack.c.b16 %v389, %v387
        %v408 = vpack.c.b16 %v390, %v388
        %v409 = vpack.c.b16 %v393, %v391
        %v410 = vpack.c.b16 %v394, %v392
        %v459 = vunpack.c.l.b16 %v315
        %v460 = vunpack.c.l.b16 %v316
        %v461 = vunpack.c.l.b16 %v317
        %v462 = vunpack.c.l.b16 %v318
        %v463 = vunpack.c.l.b16 %v319
        %v464 = vunpack.c.l.b16 %v320
        %v465 = vunpack.c.l.b16 %v321
        %v466 = vunpack.c.l.b16 %v322
        %v467 = vunpack.c.l.b16 %v323
        %v468 = vunpack.c.l.b16 %v324
        %v469 = vunpack.c.l.b16 %v325
        %v470 = vunpack.c.l.b16 %v326
        %v471 = vunpack.c.l.b16 %v327
        %v472 = vunpack.c.l.b16 %v328
        %v473 = vunpack.c.l.b16 %v329
        %v474 = vunpack.c.l.b16 %v330
        %v475 = vunpack.c.l.b16 %v331
        %v476 = vunpack.c.l.b16 %v332
        %v477 = vunpack.c.l.b16 %v333
        %v478 = vunpack.c.l.b16 %v334
        %v479 = vunpack.c.l.b16 %v335
        %v480 = vunpack.c.l.b16 %v336
        %v481 = vunpack.c.l.b16 %v337
        %v482 = vunpack.c.l.b16 %v338
        %v483 = vunpack.c.l.b16 %v339
        %v484 = vunpack.c.l.b16 %v340
        %v485 = vunpack.c.l.b16 %v341
        %v486 = vunpack.c.l.b16 %v342
        %v487 = vunpack.c.l.b16 %v343
        %v488 = vunpack.c.l.b16 %v344
        %v489 = vunpack.c.l.b16 %v345
        %v490 = vunpack.c.l.b16 %v346
        %v491 = vpack.c.b16 %v460, %v459
        %v492 = vpack.c.b16 %v462, %v461
        %v493 = vpack.c.b16 %v464, %v463
        %v494 = vpack.c.b16 %v466, %v465
        %v495 = vpack.c.b16 %v468, %v467
        %v496 = vpack.c.b16 %v470, %v469
        %v497 = vpack.c.b16 %v472, %v471
        %v498 = vpack.c.b16 %v474, %v473
        %v499 = vpack.c.b16 %v476, %v475
        %v500 = vpack.c.b16 %v478, %v477
        %v501 = vpack.c.b16 %v480, %v479
        %v502 = vpack.c.b16 %v482, %v481
        %v503 = vpack.c.b16 %v484, %v483
        %v504 = vpack.c.b16 %v486, %v485
        %v505 = vpack.c.b16 %v488, %v487
        %v506 = vpack.c.b16 %v490, %v489
        %523 = vmatpush.bf16.msra.mxu0 %v498
        %524 = vmatpush.bf16.msra.mxu0 %v497
        %525 = vmatpush.bf16.msra.mxu0 %v496
        %526 = vmatpush.bf16.msra.mxu0 %v495
        %527 = vmatpush.bf16.msra.mxu0 %v494
        %528 = vmatpush.bf16.msra.mxu0 %v493
        %529 = vmatpush.bf16.msra.mxu0 %v492
        %530 = vmatpush.bf16.msra.mxu0 %v491
        %531 = vmatmul.bf16.gmra.mxu0 %v395
        %v532 = vpop.f32.mrf.mxu0
        %v533 = vadd.f32 0.0, %v532
        %v534 = vpop.f32.mrf.mxu0
        %v535 = vadd.f32 0.0, %v534
        %536 = vmatmul.bf16.gmra.mxu0 %v397
        %v537 = vpop.f32.mrf.mxu0
        %v538 = vadd.f32 0.0, %v537
        %v539 = vpop.f32.mrf.mxu0
        %v540 = vadd.f32 0.0, %v539
        %541 = vmatmul.bf16.gmra.mxu0 %v399
        %v542 = vpop.f32.mrf.mxu0
        %v543 = vadd.f32 0.0, %v542
        %v544 = vpop.f32.mrf.mxu0
        %v545 = vadd.f32 0.0, %v544
        %546 = vmatmul.bf16.gmra.mxu0 %v401
        %v547 = vpop.f32.mrf.mxu0
        %v548 = vadd.f32 0.0, %v547
        %v549 = vpop.f32.mrf.mxu0
        %v550 = vadd.f32 0.0, %v549
        %551 = vmatmul.bf16.gmra.mxu0 %v403
        %v552 = vpop.f32.mrf.mxu0
        %v553 = vadd.f32 0.0, %v552
        %v554 = vpop.f32.mrf.mxu0
        %v555 = vadd.f32 0.0, %v554
        %556 = vmatmul.bf16.gmra.mxu0 %v405
        %v557 = vpop.f32.mrf.mxu0
        %v558 = vadd.f32 0.0, %v557
        %v559 = vpop.f32.mrf.mxu0
        %v560 = vadd.f32 0.0, %v559
        %561 = vmatmul.bf16.gmra.mxu0 %v407
        %v562 = vpop.f32.mrf.mxu0
        %v563 = vadd.f32 0.0, %v562
        %v564 = vpop.f32.mrf.mxu0
        %v565 = vadd.f32 0.0, %v564
        %566 = vmatmul.bf16.gmra.mxu0 %v409
        %v567 = vpop.f32.mrf.mxu0
        %v568 = vadd.f32 0.0, %v567
        %v569 = vpop.f32.mrf.mxu0
        %v570 = vadd.f32 0.0, %v569
        %571 = vdwg.mxu0
        %572 = vmatpush.bf16.msra.mxu0 %v506
        %573 = vmatpush.bf16.msra.mxu0 %v505
        %574 = vmatpush.bf16.msra.mxu0 %v504
        %575 = vmatpush.bf16.msra.mxu0 %v503
        %576 = vmatpush.bf16.msra.mxu0 %v502
        %577 = vmatpush.bf16.msra.mxu0 %v501
        %578 = vmatpush.bf16.msra.mxu0 %v500
        %579 = vmatpush.bf16.msra.mxu0 %v499
        %580 = vmatmul.bf16.gmra.mxu0 %v396
        %v581 = vpop.f32.mrf.mxu0
        %v582 = vadd.f32 %v533, %v581
        %v583 = vpop.f32.mrf.mxu0
        %v584 = vadd.f32 %v535, %v583
        %585 = vmatmul.bf16.gmra.mxu0 %v398
        %v586 = vpop.f32.mrf.mxu0
        %v587 = vadd.f32 %v538, %v586
        %v588 = vpop.f32.mrf.mxu0
        %v589 = vadd.f32 %v540, %v588
        %590 = vmatmul.bf16.gmra.mxu0 %v400
        %v591 = vpop.f32.mrf.mxu0
        %v592 = vadd.f32 %v543, %v591
        %v593 = vpop.f32.mrf.mxu0
        %v594 = vadd.f32 %v545, %v593
        %595 = vmatmul.bf16.gmra.mxu0 %v402
        %v596 = vpop.f32.mrf.mxu0
        %v597 = vadd.f32 %v548, %v596
        %v598 = vpop.f32.mrf.mxu0
        %v599 = vadd.f32 %v550, %v598
        %600 = vmatmul.bf16.gmra.mxu0 %v404
        %v601 = vpop.f32.mrf.mxu0
        %v602 = vadd.f32 %v553, %v601
        %v603 = vpop.f32.mrf.mxu0
        %v604 = vadd.f32 %v555, %v603
        %605 = vmatmul.bf16.gmra.mxu0 %v406
        %v606 = vpop.f32.mrf.mxu0
        %v607 = vadd.f32 %v558, %v606
        %v608 = vpop.f32.mrf.mxu0
        %v609 = vadd.f32 %v560, %v608
        %610 = vmatmul.bf16.gmra.mxu0 %v408
        %v611 = vpop.f32.mrf.mxu0
        %v612 = vadd.f32 %v563, %v611
        %v613 = vpop.f32.mrf.mxu0
        %v614 = vadd.f32 %v565, %v613
        %615 = vmatmul.bf16.gmra.mxu0 %v410
        %v616 = vpop.f32.mrf.mxu0
        %v617 = vadd.f32 %v568, %v616
        %v618 = vpop.f32.mrf.mxu0
        %v619 = vadd.f32 %v570, %v618
        %620 = vdwg.mxu0
        %v621 = vadd.f32 %v283, %v582
        %v622 = vadd.f32 %v284, %v584
        %v623 = vadd.f32 %v285, %v587
        %v624 = vadd.f32 %v286, %v589
        %v625 = vadd.f32 %v287, %v592
        %v626 = vadd.f32 %v288, %v594
        %v627 = vadd.f32 %v289, %v597
        %v628 = vadd.f32 %v290, %v599
        %v629 = vadd.f32 %v291, %v602
        %v630 = vadd.f32 %v292, %v604
        %v631 = vadd.f32 %v293, %v607
        %v632 = vadd.f32 %v294, %v609
        %v633 = vadd.f32 %v295, %v612
        %v634 = vadd.f32 %v296, %v614
        %v635 = vadd.f32 %v297, %v617
        %v636 = vadd.f32 %v298, %v619
        %637 = vst [vmem:[#allocation2] sm:$0xff] %v621
        %638 = vst [vmem:[#allocation2 + $0x8] sm:$0xff] %v622
        %639 = vst [vmem:[#allocation2 + $0x10] sm:$0xff] %v623
        %640 = vst [vmem:[#allocation2 + $0x18] sm:$0xff] %v624
        %641 = vst [vmem:[#allocation2 + $0x20] sm:$0xff] %v625
        %642 = vst [vmem:[#allocation2 + $0x28] sm:$0xff] %v626
        %643 = vst [vmem:[#allocation2 + $0x30] sm:$0xff] %v627
        %644 = vst [vmem:[#allocation2 + $0x38] sm:$0xff] %v628
        %645 = vst [vmem:[#allocation2 + $0x40] sm:$0xff] %v629
        %646 = vst [vmem:[#allocation2 + $0x48] sm:$0xff] %v630
        %647 = vst [vmem:[#allocation2 + $0x50] sm:$0xff] %v631
        %648 = vst [vmem:[#allocation2 + $0x58] sm:$0xff] %v632
        %649 = vst [vmem:[#allocation2 + $0x60] sm:$0xff] %v633
        %650 = vst [vmem:[#allocation2 + $0x68] sm:$0xff] %v634
        %651 = vst [vmem:[#allocation2 + $0x70] sm:$0xff] %v635
        %652 = vst [vmem:[#allocation2 + $0x78] sm:$0xff] %v636
        // Predicated region
        $region45: #{tpu_custom_call.1} parent=31 // pred_check
          %p653 = pneg %p263
        $region46: #{tpu_custom_call.1} parent=31 // pred_check_branch
          %655 = sbr.rel (%p653) target = $region48
        $region47: #{tpu_custom_call.1} parent=31 // pred_region
          %v656 = vld [vmem:[#allocation2] sm:$0xff]
          %v657 = vld [vmem:[#allocation2 + $0x8] sm:$0xff]
          %v658 = vld [vmem:[#allocation2 + $0x10] sm:$0xff]
          %v659 = vld [vmem:[#allocation2 + $0x18] sm:$0xff]
          %v660 = vld [vmem:[#allocation2 + $0x20] sm:$0xff]
          %v661 = vld [vmem:[#allocation2 + $0x28] sm:$0xff]
          %v662 = vld [vmem:[#allocation2 + $0x30] sm:$0xff]
          %v663 = vld [vmem:[#allocation2 + $0x38] sm:$0xff]
          %v664 = vld [vmem:[#allocation2 + $0x40] sm:$0xff]
          %v665 = vld [vmem:[#allocation2 + $0x48] sm:$0xff]
          %v666 = vld [vmem:[#allocation2 + $0x50] sm:$0xff]
          %v667 = vld [vmem:[#allocation2 + $0x58] sm:$0xff]
          %v668 = vld [vmem:[#allocation2 + $0x60] sm:$0xff]
          %v669 = vld [vmem:[#allocation2 + $0x68] sm:$0xff]
          %v670 = vld [vmem:[#allocation2 + $0x70] sm:$0xff]
          %v671 = vld [vmem:[#allocation2 + $0x78] sm:$0xff]
          %v672 = vld [vmem:[%s261] sm:$0x1]
          %v674 = vperm.slane %v672, 0
          %v676 = vadd.f32 %v656, %v674
          %v677 = vadd.f32 %v657, %v674
          %v678 = vadd.f32 %v658, %v674
          %v679 = vadd.f32 %v659, %v674
          %v680 = vadd.f32 %v660, %v674
          %v681 = vadd.f32 %v661, %v674
          %v682 = vadd.f32 %v662, %v674
          %v683 = vadd.f32 %v663, %v674
          %v684 = vadd.f32 %v664, %v674
          %v685 = vadd.f32 %v665, %v674
          %v686 = vadd.f32 %v666, %v674
          %v687 = vadd.f32 %v667, %v674
          %v688 = vadd.f32 %v668, %v674
          %v689 = vadd.f32 %v669, %v674
          %v690 = vadd.f32 %v670, %v674
          %v691 = vadd.f32 %v671, %v674
          %v692 = vmax.f32 %v676, 0.0
          %v693 = vmax.f32 %v677, 0.0
          %v694 = vmax.f32 %v678, 0.0
          %v695 = vmax.f32 %v679, 0.0
          %v696 = vmax.f32 %v680, 0.0
          %v697 = vmax.f32 %v681, 0.0
          %v698 = vmax.f32 %v682, 0.0
          %v699 = vmax.f32 %v683, 0.0
          %v700 = vmax.f32 %v684, 0.0
          %v701 = vmax.f32 %v685, 0.0
          %v702 = vmax.f32 %v686, 0.0
          %v703 = vmax.f32 %v687, 0.0
          %v704 = vmax.f32 %v688, 0.0
          %v705 = vmax.f32 %v689, 0.0
          %v706 = vmax.f32 %v690, 0.0
          %v707 = vmax.f32 %v691, 0.0
          %v708 = vpack.c.bf16 %v692, %v692
          %v709 = vpack.c.bf16 %v693, %v693
          %v710 = vpack.c.bf16 %v694, %v694
          %v711 = vpack.c.bf16 %v695, %v695
          %v712 = vpack.c.bf16 %v696, %v696
          %v713 = vpack.c.bf16 %v697, %v697
          %v714 = vpack.c.bf16 %v698, %v698
          %v715 = vpack.c.bf16 %v699, %v699
          %v716 = vpack.c.bf16 %v700, %v700
          %v717 = vpack.c.bf16 %v701, %v701
          %v718 = vpack.c.bf16 %v702, %v702
          %v719 = vpack.c.bf16 %v703, %v703
          %v720 = vpack.c.bf16 %v704, %v704
          %v721 = vpack.c.bf16 %v705, %v705
          %v722 = vpack.c.bf16 %v706, %v706
          %v723 = vpack.c.bf16 %v707, %v707
          %724 = vst [vmem:[%s255] sm:$0xf] %v708
          %725 = vst [vmem:[%s255 + $0x4] sm:$0xf] %v709
          %726 = vst [vmem:[%s255 + $0x8] sm:$0xf] %v710
          %727 = vst [vmem:[%s255 + $0xc] sm:$0xf] %v711
          %728 = vst [vmem:[%s255 + $0x10] sm:$0xf] %v712
          %729 = vst [vmem:[%s255 + $0x14] sm:$0xf] %v713
          %730 = vst [vmem:[%s255 + $0x18] sm:$0xf] %v714
          %731 = vst [vmem:[%s255 + $0x1c] sm:$0xf] %v715
          %732 = vst [vmem:[%s255 + $0x20] sm:$0xf] %v716
          %733 = vst [vmem:[%s255 + $0x24] sm:$0xf] %v717
          %734 = vst [vmem:[%s255 + $0x28] sm:$0xf] %v718
          %735 = vst [vmem:[%s255 + $0x2c] sm:$0xf] %v719
          %736 = vst [vmem:[%s255 + $0x30] sm:$0xf] %v720
          %737 = vst [vmem:[%s255 + $0x34] sm:$0xf] %v721
          %738 = vst [vmem:[%s255 + $0x38] sm:$0xf] %v722
          %739 = vst [vmem:[%s255 + $0x3c] sm:$0xf] %v723
        $region48: #{tpu_custom_call.1} parent=31 // pred_fallthru
          _
        %s740 = sand.u32 %s132, 1
        %s741 = scalar_lea.sflag [#allocation5], %s740
        %s742 = sand.u32 %s132, 1
        %s743 = smul.addr %s742, 64
        %s744 = scalar_lea.vmem [#allocation8], %s743
        // Predicated region
        $region49: #{tpu_custom_call.1} parent=31 // pred_check
          %p745 = pneg %p142
        $region50: #{tpu_custom_call.1} parent=31 // pred_check_branch
          %747 = sbr.rel (%p745) target = $region52
        $region51: #{tpu_custom_call.1} parent=31 // pred_region
          %s748 = smul.u32 16, %s26
          %750 = vsyncadd %s741, 0
          %s751 = sadd.s32 %s27, %s748
          %s752 = smul.addr %s751, 4
          %s753 = scalar_lea.hbm %s3, %s752
          %s754 = sshll.u32 %s744, 4
          %s755 = int_to_ptr.vmem [resolvable:$true] %s754
          %s756 = sshll.u32 %s753, 4
          %s757 = int_to_ptr.hbm [resolvable:$true] %s756
          %762 = dma.vmem_to_hbm [thread:$0]  %s755, 1024, %s757, %s741, 64, 64, 4
        $region52: #{tpu_custom_call.1} parent=31 // pred_fallthru
          _
      $region32: #{tpu_custom_call.1} parent=5 // pred_fallthru
        _
      %p763 = scmp.le.s32.totalorder 2, %s16
      // Predicated region
      $region53: #{tpu_custom_call.1} parent=5 // pred_check
        %p764 = pneg %p763
      $region54: #{tpu_custom_call.1} parent=5 // pred_check_branch
        %766 = sbr.rel (%p764) target = $region56
      $region55: #{tpu_custom_call.1} parent=5 // pred_region
        %s767 = ssub.s32 %s16, 2
        // Predicated region
        $region57: #{tpu_custom_call.1} parent=55 // pred_check
          %p768 = pneg %p148
        $region58: #{tpu_custom_call.1} parent=55 // pred_check_branch
          %770 = sbr.rel (%p768) target = $region60
        $region59: #{tpu_custom_call.1} parent=55 // pred_region
          %s771 = sand.u32 %s133, 1
          %s772 = scalar_lea.sflag [#allocation5], %s771
          %s773 = sand.u32 %s133, 1
          %s774 = smul.addr %s773, 64
          %s775 = scalar_lea.vmem [#allocation8], %s774
          %777 = dma.done %s772, 1024
        $region60: #{tpu_custom_call.1} parent=55 // pred_fallthru
          _
      $region56: #{tpu_custom_call.1} parent=5 // pred_fallthru
        _
    $region6: #{tpu_custom_call.1} parent=1 // loop_footer
      %s20 = sadd.s32 1, %s16
    $region7: #{tpu_custom_call.1} parent=1 // loop_footer_branch
      %15 = sbr.rel target = $region3
    $region8: #{tpu_custom_call.1} parent=1 // loop_exit
      _
    %778 = vsyncpa [#allocation4], 1
    %s779 = scalar_lea.sflag [#allocation4], 1
    %780 = vsyncpa %s779, 1
    %781 = vsyncpa [#allocation7], 1
    %782 = vsyncpa [#allocation5], 1
    %s783 = scalar_lea.sflag [#allocation5], 1
    %784 = vsyncpa %s783, 1

</llo_original>
